<compile_context>
chip_gen: v5e
topology: v5e:2x2
jax: 0.10.0
libtpu: 0.0.40
codegen_flags: <defaults>
</compile_context>

<pallas_src>
import math

import jax
import jax.numpy as jnp
from jax.experimental import pallas as pl
from jax.experimental.pallas import tpu as pltpu

_LANE = 128
_SUBLANE = 8
_MIB = 1024 * 1024
_XLA_FALLBACK_ELEMS = 1 << 20  # below this, XLA's fused op beats pallas_call fixed costs


def _round_up(v, m):
    return ((v + m - 1) // m) * m


def _device_kind():
    try:
        return jax.devices()[0].device_kind.lower()
    except Exception:
        return ""


def _vmem_budget_and_limit():
    """(buffer byte budget, vmem_limit_bytes) per TPU generation."""
    kind = _device_kind()
    if "v7" in kind or "tpu7" in kind:
        # 64 MiB physical / 32 MiB default scoped VMEM: stay well inside.
        return 24 * _MIB, 32 * _MIB
    if "v6" in kind:
        # 128 MiB physical + fast HBM: bigger tiles amortize the ~0.35us/step cost.
        return 48 * _MIB, 64 * _MIB
    # v5e and friends: default scoped limit is only 16 MiB -> raise it explicitly
    # (physical VMEM is 128 MiB) and keep buffers modest.
    return 20 * _MIB, 32 * _MIB


def _dimension_semantics_candidates():
    kind = _device_kind()
    cands = []
    if ("v7" in kind or "tpu7" in kind) and hasattr(pltpu, "CORE_PARALLEL"):
        # v7x has 2 TensorCores/chip: explicitly split independent batch tiles.
        cands.append((pltpu.CORE_PARALLEL,))
    cands.append(("parallel",))  # no-op on single-TC chips, harmless everywhere
    return cands


def _linear_kernel(x_ref, w_ref, b_ref, o_ref):
    # x_ref: (TB, C) packed batch rows (C = G * F), streamed through VMEM.
    # w_ref: (C, G)  block-diagonal weight, resident across all tiles.
    # b_ref: (1, 1)  scalar bias in SMEM.
    # o_ref: (TB, G) outputs; out[r, g] = sum_f x[r, g*F + f] * w[f] + b.
    y = jnp.dot(x_ref[...], w_ref[...], preferred_element_type=jnp.float32)
    o_ref[...] = (y + b_ref[0, 0]).astype(o_ref.dtype)


def line_nn_forward(x, weight, bias, *, max_block_rows=None, force_pallas=False):
    """Pallas equivalent of torch.nn.Linear(n_feature, 1) forward.

    x:      (B, F) float32
    weight: (1, F) float32  (PyTorch layout: out_features x in_features)
    bias:   (1,)   float32
    returns (B, 1) float32
    """
    B, F = x.shape
    x = jnp.asarray(x, jnp.float32)
    w_row = jnp.asarray(weight, jnp.float32).reshape(1, F)
    b2d = jnp.asarray(bias, jnp.float32).reshape(1, 1)

    # Tiny problems: grid setup / per-step / DMA-latency fixed costs dominate.
    if not force_pallas and B * F < _XLA_FALLBACK_ELEMS:
        return (x @ w_row.T + b2d[0, 0]).astype(jnp.float32)

    # ---- batch-row packing (small F) ----------------------------------------
    # For F | 128, pack G = 128 // F batch rows into one 128-lane row via a free
    # row-major reshape.  G is clipped to a divisor of B (gcd) so no pad / copy
    # of X is ever needed.  F >= 128 (or irregular F) uses G = 1 unchanged; the
    # (TB, 1) output is then <= 1/F of input traffic, so its masked store is
    # hidden under the input DMA.
    if F <= 64 and 128 % F == 0:
        G = math.gcd(128 // F, B)
    else:
        G = 1
    C = G * F
    rows = B // G
    x_packed = x.reshape(rows, C)  # free: contiguous row-major reshape

    # Block-diagonal weight (C, G): wbd[g*F + f, g'] = w[f] if g == g' else 0.
    # For G == 1 this is just weight^T of shape (F, 1).
    eye = jnp.eye(G, dtype=jnp.float32)
    wbd = (eye[:, None, :] * w_row.reshape(1, F, 1)).reshape(C, G)

    # ---- batch-tile sizing from a lane-padding-aware VMEM budget -------------
    budget, vmem_limit = _vmem_budget_and_limit()
    c_pad = _round_up(C, _LANE)   # VMEM pads the minor dim to 128 lanes
    g_pad = _round_up(G, _LANE)
    w_vmem = 2 * _round_up(C, _SUBLANE) * g_pad * 4       # resident weight (x2 buffers)
    row_vmem = 2 * (c_pad + g_pad) * 4                    # per row: dbl-buffered in + out
    # TODO(synk): if F is so large that even an 8-row tile + weight blow the budget,
    # add a second "arbitrary" grid axis over F with a VMEM f32 accumulator instead
    # of shrinking the batch tile further.
    avail = max(budget - w_vmem, _SUBLANE * row_vmem)
    tb = max(_SUBLANE, (avail // row_vmem) // _SUBLANE * _SUBLANE)
    if max_block_rows is not None:
        tb = min(tb, max(_SUBLANE, max_block_rows // _SUBLANE * _SUBLANE))
    tb = min(tb, _round_up(rows, _SUBLANE))               # don't over-tile tiny batches
    n_tiles = pl.cdiv(rows, tb)

    call_kwargs = dict(
        out_shape=jax.ShapeDtypeStruct((rows, G), jnp.float32),
        grid=(n_tiles,),
        in_specs=[
            pl.BlockSpec((tb, C), lambda i: (i, 0)),              # streamed X tiles
            pl.BlockSpec((C, G), lambda i: (0, 0)),               # resident weights
            pl.BlockSpec(memory_space=pltpu.MemorySpace.SMEM),    # scalar bias
        ],
        out_specs=pl.BlockSpec((tb, G), lambda i: (i, 0)),        # lane-dense(ish) output
    )

    last_err = None
    for dim_sem in _dimension_semantics_candidates():
        try:
            out = pl.pallas_call(
                _linear_kernel,
                compiler_params=pltpu.CompilerParams(
                    dimension_semantics=dim_sem,
                    vmem_limit_bytes=vmem_limit,
                ),
                **call_kwargs,
            )(x_packed, wbd, b2d)
            # Each (rows, G) row holds G consecutive batch elements -> free reshape.
            return out.reshape(B, 1)
        except Exception as err:  # e.g. CORE_PARALLEL rejected -> retry "parallel"
            last_err = err
    raise last_err


if __name__ == "__main__":
    # Correctness harness.  Inputs are drawn on a small integer grid so every
    # product/partial-sum is exact in bf16/f32; the check is then independent of
    # which f32 MXU pass-decomposition Mosaic picks, and the tolerance stays tight.
    def make_inputs(key, batch, n_feature):
        kx, kw, kb = jax.random.split(key, 3)
        x = jax.random.randint(kx, (batch, n_feature), -8, 8).astype(jnp.float32) / 4.0
        w = jax.random.randint(kw, (1, n_feature), -8, 8).astype(jnp.float32) / 8.0
        b = jax.random.randint(kb, (1,), -8, 8).astype(jnp.float32) / 8.0
        return x, w, b

    root = jax.random.PRNGKey(0)
    cases = [
        # (batch, n_feature, max_block_rows) -- first case is the LineNN demo shape.
        (8, 4, None),       # packed path (G=8), single (ragged) tile
        (4096, 4, None),    # packed path (G=32), full 128-lane packed rows
        (1003, 96, 256),    # general path (G=1), multi-tile pipeline + ragged last tile
    ]
    for idx, (batch, n_feature, mbr) in enumerate(cases):
        x, w, b = make_inputs(jax.random.fold_in(root, idx), batch, n_feature)
        y = line_nn_forward(x, w, b, max_block_rows=mbr, force_pallas=True)
        y = jax.block_until_ready(y)
        y_ref = x @ w.T + b  # same math as torch.nn.Linear(n_feature, 1)
        assert y.shape == (batch, 1)
        assert jnp.allclose(y, y_ref, atol=1e-5, rtol=1e-5), (batch, n_feature)

    print("KERNEL_OK")
</pallas_src>

<mosaic_0001>
module attributes {stable_mosaic.version = 11 : i64} {
  func.func @_linear_kernel(%arg0: i32, %arg1: memref<8x32xf32, #tpu.memory_space<vmem>>, %arg2: memref<32x8xf32, #tpu.memory_space<vmem>>, %arg3: memref<1x1xf32, #tpu.memory_space<smem>>, %arg4: memref<8x8xf32, #tpu.memory_space<vmem>>) attributes {dimension_semantics = [#tpu.dimension_semantics<parallel>], iteration_bounds = array<i64: 1>, scalar_prefetch = 0 : i64, scratch_operands = 0 : i64, tpu.core_type = #tpu.core_type<tc>, window_params = [{transform_indices = @transform_0, window_bounds = array<i64: 8, 32>}, {pipeline_mode = #tpu.pipeline_mode<synchronous>, transform_indices = @transform_1, window_bounds = array<i64: 32, 8>}, {transform_indices = @transform_2, window_bounds = array<i64: 1, 1>}, {transform_indices = @transform_3, window_bounds = array<i64: 8, 8>}]} {
    %c0 = arith.constant 0 : index
    %c0_0 = arith.constant 0 : index
    %0 = vector.load %arg1[%c0, %c0_0] : memref<8x32xf32, #tpu.memory_space<vmem>>, vector<8x32xf32>
    %c0_1 = arith.constant 0 : index
    %c0_2 = arith.constant 0 : index
    %1 = vector.load %arg2[%c0_1, %c0_2] : memref<32x8xf32, #tpu.memory_space<vmem>>, vector<32x8xf32>
    %cst = arith.constant dense<0.000000e+00> : vector<8x8xf32>
    %2 = tpu.matmul %0, %1, %cst {dimension_numbers = #tpu.dot_dimension_numbers<[1], [0], [0], [1], [0, 0, 1, 1], [], []>} : vector<8x32xf32>, vector<32x8xf32>, vector<8x8xf32> -> vector<8x8xf32>
    %c0_3 = arith.constant 0 : index
    %c0_4 = arith.constant 0 : index
    %3 = memref.load %arg3[%c0_3, %c0_4] : memref<1x1xf32, #tpu.memory_space<smem>>
    %4 = vector.broadcast %3 : f32 to vector<8x8xf32>
    %5 = arith.addf %2, %4 : vector<8x8xf32>
    %c0_5 = arith.constant 0 : index
    %c0_6 = arith.constant 0 : index
    %6 = vector.load %arg4[%c0_5, %c0_6] : memref<8x8xf32, #tpu.memory_space<vmem>>, vector<8x8xf32>
    tpu.vector_store %arg4[%c0_5, %c0_6], %5 {strides = array<i32>} : memref<8x8xf32, #tpu.memory_space<vmem>>, vector<8x8xf32>,
    return
  }
  func.func @transform_0(%arg0: i32) -> (i32, i32) {
    %c0_i32 = arith.constant 0 : i32
    %c0_i32_0 = arith.constant 0 : i32
    return %arg0, %c0_i32 : i32, i32
  }
  func.func @transform_1(%arg0: i32) -> (i32, i32) {
    %c0_i32 = arith.constant 0 : i32
    %c0_i32_0 = arith.constant 0 : i32
    %c0_i32_1 = arith.constant 0 : i32
    return %c0_i32, %c0_i32_0 : i32, i32
  }
  func.func @transform_2(%arg0: i32) -> (i32, i32) {
    %c0_i32 = arith.constant 0 : i32
    %c0_i32_0 = arith.constant 0 : i32
    %c0_i32_1 = arith.constant 0 : i32
    return %c0_i32, %c0_i32_0 : i32, i32
  }
  func.func @transform_3(%arg0: i32) -> (i32, i32) {
    %c0_i32 = arith.constant 0 : i32
    %c0_i32_0 = arith.constant 0 : i32
    return %arg0, %c0_i32 : i32, i32
  }
}

</mosaic_0001>

<llo_original>
// kernel: tpu_custom_call.1
$region0: #{tpu_custom_call.1}
  #allocation0 [shape = 'u32[]', space=smem, size = 0x4, offset = 0x4, fixed_abs, tag = 'smem constant byte address 0x4 - core index']
  #allocation1 [shape = 'u32[72,128]{1,0:T(1,128)}', space=vmem, size = 0x9000, scoped, tag = 'internal scratch']
  #allocation2 [shape = 'f32[1,1]{1,0:T(1,128)S(6)}', space=smem, size = 0x200, scoped, tag = 'scoped memory for tpu_custom_call.1']
  %s0 = inlined_call_operand.vmem [shape: f32[1,32], index: 0, kind: input, shape index: {}]
  %s1 = inlined_call_operand.vmem [shape: f32[32,8], index: 1, kind: input, shape index: {}]
  %s2 = inlined_call_operand.<no memory space> [shape: f32[1,1], index: 2, kind: input, shape index: {}]
  %s3 = inlined_call_operand.hbm [shape: f32[1,8], index: 3, kind: output, shape index: {}]
  %s4 = sld [smem:[#allocation0]]
  $region22: #{tpu_custom_call.1} parent=0
    _
  %s6 = ssub.s32 1, %s4
  %s7 = scalar_select 0, %s6, %s4
  %8 = sst [smem:[#allocation2]] %s2
  $region1: #{tpu_custom_call.1} parent=0
    #allocation3 [shape = 'u8[4096]{0}', space=vmem, size = 0x1000, scoped, tag = 'output window, operand 0, single buffered']
    #allocation4 [shape = 's32[1]{0}', space=sflag, size = 0x4, scoped, tag = 'scoped memory for tpu_custom_call.1']
    %9 = vsyncpa [#allocation4], 0
    // Predicated region
    $region2: #{tpu_custom_call.1} parent=1 // pred_check
      _
    $region3: #{tpu_custom_call.1} parent=1 // pred_check_branch
      %11 = sbr.rel (0) target = $region5
    $region4: #{tpu_custom_call.1} parent=1 // pred_region
      _
    $region5: #{tpu_custom_call.1} parent=1 // pred_fallthru
      _
    // Predicated region
    $region6: #{tpu_custom_call.1} parent=1 // pred_check
      _
    $region7: #{tpu_custom_call.1} parent=1 // pred_check_branch
      %13 = sbr.rel (0) target = $region9
    $region8: #{tpu_custom_call.1} parent=1 // pred_region
      _
    $region9: #{tpu_custom_call.1} parent=1 // pred_fallthru
      _
    // Predicated region
    $region10: #{tpu_custom_call.1} parent=1 // pred_check
      _
    $region11: #{tpu_custom_call.1} parent=1 // pred_check_branch
      %15 = sbr.rel (0) target = $region13
    $region12: #{tpu_custom_call.1} parent=1 // pred_region
      _
    $region13: #{tpu_custom_call.1} parent=1 // pred_fallthru
      _
    %v16 = vld [vmem:[%s0] sm:$0xff]
    %v17 = vld [vmem:[%s1] sm:$0xff]
    %v18 = vld [vmem:[%s1 + $0x8] sm:$0xff]
    %v19 = vld [vmem:[%s1 + $0x10] sm:$0xff]
    %v20 = vld [vmem:[%s1 + $0x18] sm:$0xff]
    %s21 = sld [smem:[#allocation2]]
    %v22 = vstv %s21
    %vm23 = vcmask 261120
    %v25 = vsel %vm23, %v16, 0
    %27 = vmatpush.msra.mxu0 0.0
    %28 = vmatpush.msra.mxu0 0.0
    %29 = vmatpush.msra.mxu0 0.0
    %30 = vmatpush.msra.mxu0 0.0
    %31 = vmatpush.msra.mxu0 0.0
    %32 = vmatpush.msra.mxu0 0.0
    %33 = vmatpush.msra.mxu0 0.0
    %34 = vmatpush.msra.mxu0 0.0
    %35 = vmatpush.msra.mxu0 0.0
    %36 = vmatpush.msra.mxu0 0.0
    %37 = vmatpush.msra.mxu0 0.0
    %38 = vmatpush.msra.mxu0 0.0
    %39 = vmatpush.msra.mxu0 %v20
    %40 = vmatpush.msra.mxu0 %v19
    %41 = vmatpush.msra.mxu0 %v18
    %42 = vmatpush.msra.mxu0 %v17
    %43 = vmatmul.f32.gmra.mxu0 %v25
    %v44 = vpop.f32.mrf.mxu0
    %v45 = vadd.f32 %v22, %v44
    %46 = vdwg.mxu0
    %vm47 = vcmask 64512
    %48 = vst.msk [vmem:[#allocation3] sm:$0xff] %vm47, %v45
    // Predicated region
    $region14: #{tpu_custom_call.1} parent=1 // pred_check
      _
    $region15: #{tpu_custom_call.1} parent=1 // pred_check_branch
      %50 = sbr.rel (0) target = $region17
    $region16: #{tpu_custom_call.1} parent=1 // pred_region
      %52 = vsyncadd [#allocation4], 112
      %s53 = sshll.u32 [#allocation3], 4
      %s54 = int_to_ptr.vmem [resolvable:$true] %s53
      %s55 = sshll.u32 %s3, 4
      %s56 = int_to_ptr.hbm [resolvable:$true] %s55
      %61 = dma.vmem_to_hbm [thread:$0]  %s54, 16, %s56, [#allocation4], 16, 16, 1
    $region17: #{tpu_custom_call.1} parent=1 // pred_fallthru
      _
    // Predicated region
    $region18: #{tpu_custom_call.1} parent=1 // pred_check
      _
    $region19: #{tpu_custom_call.1} parent=1 // pred_check_branch
      %63 = sbr.rel (0) target = $region21
    $region20: #{tpu_custom_call.1} parent=1 // pred_region
      %65 = dma.done [#allocation4], 128
    $region21: #{tpu_custom_call.1} parent=1 // pred_fallthru
      _
    %66 = vsyncpa [#allocation4], 1

</llo_original>
